<compile_context>
chip_gen: v6e
topology: v6e:2x2x1
jax: 0.10.0
libtpu: 0.0.40
codegen_flags: <defaults>
</compile_context>

<pallas_src>
import jax
import jax.numpy as jnp
from jax.experimental import pallas as pl
from jax.experimental.pallas import tpu as pltpu


# ----------------------------------------------------------------------------
# helpers
# ----------------------------------------------------------------------------

def _round_up(x, m):
    return (x + m - 1) // m * m


def _pick_tile(padded_dim, candidates):
    for c in candidates:
        if c <= padded_dim and padded_dim % c == 0:
            return c
    return padded_dim


def _vmem_budget_bytes():
    """Per-chip VMEM budget for tiles (double-buffered) + explicit scoped limit."""
    try:
        cap = int(pltpu.get_tpu_info().vmem_capacity_bytes)
    except Exception:
        cap = 64 * 1024 * 1024          # conservative fallback (v7x physical)
    # v5e/v6e (128 MiB) -> 96 MiB ; v7x (64 MiB) -> 48 MiB.
    return min(cap * 3 // 4, 96 * 1024 * 1024)


def _shrink_to_budget(tm, tk, tn, xs, ws, os_, granule, need_scratch, budget):
    """Shrink tiles until the double-buffered footprint fits the VMEM budget."""
    def footprint(tm, tk, tn):
        fp = 2 * (tm * tk * xs + tk * tn * ws + tn * 4) + 2 * tm * tn * os_
        if need_scratch:
            fp += tm * tn * 4
        return fp

    while footprint(tm, tk, tn) > budget:
        if tk > 128 and tk >= tn and tk >= tm:
            tk //= 2
        elif tn > 128 and tn >= tm:
            tn //= 2
        elif tm > granule:
            tm = max(granule, (tm // 2) // granule * granule)
        elif tk > 128:
            tk //= 2
        elif tn > 128:
            tn //= 2
        else:
            break
    return tm, tk, tn


# ----------------------------------------------------------------------------
# kernels
# ----------------------------------------------------------------------------

def _output_layer_kernel_f32(x_ref, w_ref, b_ref, o_ref):
    # f32 output: the output block index ignores k, so o_ref stays resident in
    # VMEM across the K reduction -> accumulate directly (no scratch).  Bias is
    # folded in at k == 0 instead of an epilogue add.
    @pl.when(pl.program_id(2) == 0)
    def _():
        o_ref[...] = jnp.broadcast_to(b_ref[...], o_ref.shape)

    o_ref[...] += jnp.dot(x_ref[...], w_ref[...],
                          preferred_element_type=jnp.float32)


def _output_layer_kernel_cast(x_ref, w_ref, b_ref, o_ref, acc_ref):
    # Narrow-output variant: keep an f32 accumulator scratch, cast at the end.
    k = pl.program_id(2)

    @pl.when(k == 0)
    def _():
        acc_ref[...] = jnp.broadcast_to(b_ref[...], acc_ref.shape)

    acc_ref[...] += jnp.dot(x_ref[...], w_ref[...],
                            preferred_element_type=jnp.float32)

    @pl.when(k == pl.num_programs(2) - 1)
    def _():
        o_ref[...] = acc_ref[...].astype(o_ref.dtype)


def _output_layer_kernel_single(x_ref, w_ref, b_ref, o_ref):
    # Small-shape fast path: the whole problem is one block (grid=()).
    o_ref[...] = (jnp.dot(x_ref[...], w_ref[...],
                          preferred_element_type=jnp.float32)
                  + b_ref[...]).astype(o_ref.dtype)


# ----------------------------------------------------------------------------
# parameter packing + forward
# ----------------------------------------------------------------------------

def prepare_output_layer_params(weight, bias, compute_dtype=None):
    """Pack PyTorch-layout params once (no per-call transpose / padding).

    weight: (out_features, in_features)   -- nn.Linear convention
    bias:   (out_features,)
    compute_dtype: optional MXU dtype (e.g. jnp.bfloat16) for the packed weight;
                   bias stays f32 (it initializes the f32 accumulator exactly).
    """
    out_features, in_features = weight.shape
    k_pad = _round_up(in_features, 128)
    n_pad = _round_up(out_features, 128)
    w_dtype = compute_dtype if compute_dtype is not None else weight.dtype
    w_packed = jnp.zeros((k_pad, n_pad), w_dtype)
    w_packed = w_packed.at[:in_features, :out_features].set(
        weight.T.astype(w_dtype))
    b_packed = jnp.zeros((1, n_pad), jnp.float32)
    b_packed = b_packed.at[0, :out_features].set(bias.astype(jnp.float32))
    return w_packed, b_packed, in_features, out_features


def _matmul_bias_tiled(x2d, w_packed, b_packed, out_dtype, budget):
    m, k = x2d.shape
    k_pad, n_pad = w_packed.shape
    xs = jnp.dtype(x2d.dtype).itemsize
    ws = jnp.dtype(w_packed.dtype).itemsize
    os_ = jnp.dtype(out_dtype).itemsize
    granule = {4: 8, 2: 16, 1: 32}.get(xs, 8)   # sublane packing per dtype

    # K padding must be explicit zeros (padded weight rows are zero, but
    # garbage activations * 0 could still be NaN).  M padding is NOT needed;
    # ragged output rows are masked on writeback.
    if k != k_pad:
        x2d = jnp.pad(x2d, ((0, 0), (0, k_pad - k)))
    m_rows = m
    if m_rows < granule:                          # tiny-M guard (cheap pad)
        x2d = jnp.pad(x2d, ((0, granule - m_rows), (0, 0)))
        m_rows = granule

    tn = _pick_tile(n_pad, (1024, 512, 256, 128))
    tk = _pick_tile(k_pad, (1024, 512, 256, 128))
    tm = min(1024, (m_rows // granule) * granule)

    need_scratch = jnp.dtype(out_dtype) != jnp.dtype(jnp.float32)
    tm, tk, tn = _shrink_to_budget(tm, tk, tn, xs, ws, os_, granule,
                                   need_scratch, budget)

    grid_m = pl.cdiv(m_rows, tm)
    grid_n = n_pad // tn
    grid_k = k_pad // tk

    # v7x: keep >= 2 parallel blocks so both TensorCores get work on big shapes.
    if grid_m * grid_n == 1 and tm >= 2 * granule and m_rows * k_pad * n_pad >= (1 << 24):
        tm = max(granule, (tm // 2) // granule * granule)
        grid_m = pl.cdiv(m_rows, tm)

    # Realistic streamed traffic: weight is re-read per M tile, x per N tile.
    cost = pl.CostEstimate(
        flops=2 * m_rows * k_pad * n_pad,
        bytes_accessed=(grid_n * m_rows * k_pad * xs
                        + grid_m * k_pad * n_pad * ws
                        + n_pad * 4
                        + m_rows * n_pad * os_),
        transcendentals=0,
    )

    kernel = _output_layer_kernel_cast if need_scratch else _output_layer_kernel_f32
    scratch = [pltpu.VMEM((tm, tn), jnp.float32)] if need_scratch else []

    out = pl.pallas_call(
        kernel,
        out_shape=jax.ShapeDtypeStruct((m_rows, n_pad), out_dtype),
        grid=(grid_m, grid_n, grid_k),
        in_specs=[
            pl.BlockSpec((tm, tk), lambda i, j, kk: (i, kk)),
            pl.BlockSpec((tk, tn), lambda i, j, kk: (kk, j)),
            pl.BlockSpec((1, tn), lambda i, j, kk: (0, j)),
        ],
        out_specs=pl.BlockSpec((tm, tn), lambda i, j, kk: (i, j)),
        scratch_shapes=scratch,
        compiler_params=pltpu.CompilerParams(
            dimension_semantics=("parallel", "parallel", "arbitrary"),
            vmem_limit_bytes=int(budget)),
        cost_estimate=cost,
    )(x2d, w_packed, b_packed)

    return out[:m]


def _matmul_bias(x2d, w_packed, b_packed, out_dtype, *, force_tiled=False):
    """x2d: (M, K); w_packed: (K_pad, N_pad); b_packed (f32): (1, N_pad) -> (M, N_pad)."""
    m, k = x2d.shape
    k_pad, n_pad = w_packed.shape
    xs = jnp.dtype(x2d.dtype).itemsize
    ws = jnp.dtype(w_packed.dtype).itemsize
    os_ = jnp.dtype(out_dtype).itemsize
    budget = _vmem_budget_bytes()

    # Small-shape fast path: everything fits comfortably in one block.
    single_fp = m * k_pad * xs + k_pad * n_pad * ws + n_pad * 4 + m * n_pad * os_
    if not force_tiled and single_fp <= min(budget // 3, 12 * 1024 * 1024):
        x_p = x2d if k == k_pad else jnp.pad(x2d, ((0, 0), (0, k_pad - k)))
        return pl.pallas_call(
            _output_layer_kernel_single,
            out_shape=jax.ShapeDtypeStruct((m, n_pad), out_dtype),
        )(x_p, w_packed, b_packed)

    return _matmul_bias_tiled(x2d, w_packed, b_packed, out_dtype, budget)


def output_layer_forward(x, w_packed, b_packed, in_features, out_features,
                         *, force_tiled=False):
    """Pallas equivalent of OutputLayer.forward: x.squeeze() then Linear."""
    x = jnp.squeeze(x)  # matches torch .squeeze(): drops ALL singleton dims
    if x.ndim == 0:
        raise ValueError("input squeezed to a scalar; cannot apply Linear")
    if x.shape[-1] != in_features:
        raise ValueError(
            f"last dim after squeeze ({x.shape[-1]}) != in_features ({in_features})")

    out_dtype = x.dtype
    lead_shape = x.shape[:-1]
    x2d = x.reshape((-1, in_features))
    if x2d.dtype != w_packed.dtype:          # bf16 (etc.) compute path
        x2d = x2d.astype(w_packed.dtype)

    y2d = _matmul_bias(x2d, w_packed, b_packed, out_dtype,
                       force_tiled=force_tiled)
    return y2d[:, :out_features].reshape(lead_shape + (out_features,))


def init_output_layer_params(key, input_size, output_size, dtype=jnp.float32):
    """Deterministic init mimicking nn.Linear default (uniform +/- 1/sqrt(in))."""
    k_w, k_b = jax.random.split(key)
    bound = 1.0 / float(jnp.sqrt(jnp.array(input_size, dtype=jnp.float32)))
    weight = jax.random.uniform(k_w, (output_size, input_size), dtype,
                                minval=-bound, maxval=bound)
    bias = jax.random.uniform(k_b, (output_size,), dtype,
                              minval=-bound, maxval=bound)
    return weight, bias


# ----------------------------------------------------------------------------
# demo / self-check
# ----------------------------------------------------------------------------

if __name__ == "__main__":
    key = jax.random.PRNGKey(0)
    k_x, k_x2, k_x3, k_p, k_p3 = jax.random.split(key, 5)
    HI = jax.lax.Precision.HIGHEST

    input_size, output_size, batch = 32, 16, 8
    weight, bias = init_output_layer_params(k_p, input_size, output_size)
    w_f32, b_f32, in_f, out_f = prepare_output_layer_params(weight, bias)

    # Case 1: singleton dim squeezed away (the module's use case) -> fast path.
    x = jax.random.normal(k_x, (batch, 1, input_size), dtype=jnp.float32)
    y = output_layer_forward(x, w_f32, b_f32, in_f, out_f)
    jax.block_until_ready(y)
    ref = jnp.matmul(jnp.squeeze(x), weight.T, precision=HI) + bias
    assert y.shape == (batch, output_size)
    assert jnp.allclose(y, ref, atol=1e-2, rtol=1e-2)  # loose: MXU f32 multi-pass

    # Case 2: >2-D after squeeze (Linear over trailing dim, leading dims kept).
    x2 = jax.random.normal(k_x2, (2, batch, input_size), dtype=jnp.float32)
    y2 = output_layer_forward(x2, w_f32, b_f32, in_f, out_f)
    jax.block_until_ready(y2)
    ref2 = jnp.matmul(x2, weight.T, precision=HI) + bias
    assert y2.shape == (2, batch, output_size)
    assert jnp.allclose(y2, ref2, atol=1e-2, rtol=1e-2)

    # Case 3: force the tiled (grid) path: ragged M/N, K padded + multi-step K.
    in3, out3, m3 = 300, 200, 40
    w3, bias3 = init_output_layer_params(k_p3, in3, out3)
    w3p, b3p, in3f, out3f = prepare_output_layer_params(w3, bias3)
    x3 = jax.random.normal(k_x3, (m3, 1, in3), dtype=jnp.float32)
    y3 = output_layer_forward(x3, w3p, b3p, in3f, out3f, force_tiled=True)
    jax.block_until_ready(y3)
    ref3 = jnp.matmul(jnp.squeeze(x3), w3.T, precision=HI) + bias3
    assert y3.shape == (m3, out3)
    assert jnp.allclose(y3, ref3, atol=1e-2, rtol=1e-2)

    # Case 4: bf16 compute packing (f32 accumulation / f32 output kept).
    w_bf, b_bf, _, _ = prepare_output_layer_params(weight, bias,
                                                   compute_dtype=jnp.bfloat16)
    y_bf = output_layer_forward(x, w_bf, b_bf, in_f, out_f)
    jax.block_until_ready(y_bf)
    assert y_bf.shape == (batch, output_size)
    assert jnp.allclose(y_bf, ref, atol=1e-1, rtol=5e-2)

    print("KERNEL_OK")
</pallas_src>

<mosaic_0001>
module attributes {stable_mosaic.version = 11 : i64} {
  func.func @_output_layer_kernel_single(%arg0: memref<8x128xf32, #tpu.memory_space<vmem>>, %arg1: memref<128x128xf32, #tpu.memory_space<vmem>>, %arg2: memref<1x128xf32, #tpu.memory_space<vmem>>, %arg3: memref<8x128xf32, #tpu.memory_space<vmem>>) attributes {dimension_semantics = [], scalar_prefetch = 0 : i64, scratch_operands = 0 : i64, tpu.core_type = #tpu.core_type<tc>} {
    %c0 = arith.constant 0 : index
    %c0_0 = arith.constant 0 : index
    %0 = vector.load %arg0[%c0, %c0_0] : memref<8x128xf32, #tpu.memory_space<vmem>>, vector<8x128xf32>
    %c0_1 = arith.constant 0 : index
    %c0_2 = arith.constant 0 : index
    %1 = vector.load %arg1[%c0_1, %c0_2] : memref<128x128xf32, #tpu.memory_space<vmem>>, vector<128x128xf32>
    %cst = arith.constant dense<0.000000e+00> : vector<8x128xf32>
    %2 = tpu.matmul %0, %1, %cst {dimension_numbers = #tpu.dot_dimension_numbers<[1], [0], [0], [1], [0, 0, 1, 1], [], []>} : vector<8x128xf32>, vector<128x128xf32>, vector<8x128xf32> -> vector<8x128xf32>
    %c0_3 = arith.constant 0 : index
    %c0_4 = arith.constant 0 : index
    %3 = vector.load %arg2[%c0_3, %c0_4] : memref<1x128xf32, #tpu.memory_space<vmem>>, vector<1x128xf32>
    %4 = vector.broadcast %3 : vector<1x128xf32> to vector<8x128xf32>
    %5 = arith.addf %2, %4 : vector<8x128xf32>
    %c0_5 = arith.constant 0 : index
    %c0_6 = arith.constant 0 : index
    %6 = vector.load %arg3[%c0_5, %c0_6] : memref<8x128xf32, #tpu.memory_space<vmem>>, vector<8x128xf32>
    tpu.vector_store %arg3[%c0_5, %c0_6], %5 {strides = array<i32>} : memref<8x128xf32, #tpu.memory_space<vmem>>, vector<8x128xf32>,
    return
  }
}

</mosaic_0001>

<llo_original>
// kernel: tpu_custom_call.1
$region0: #{tpu_custom_call.1}
  #allocation0 [shape = 'u32[]', space=smem, size = 0x4, offset = 0x4, fixed_abs, tag = 'smem constant byte address 0x4 - core index']
  #allocation1 [shape = 'u32[144,128]{1,0:T(1,128)}', space=vmem, size = 0x12000, scoped, tag = 'internal scratch']
  %s0 = inlined_call_operand.hbm [shape: f32[8,128], index: 0, kind: input, shape index: {}]
  %s1 = inlined_call_operand.hbm [shape: f32[128,128], index: 1, kind: input, shape index: {}]
  %s2 = inlined_call_operand.vmem [shape: f32[1,128], index: 2, kind: input, shape index: {}]
  %s3 = inlined_call_operand.hbm [shape: f32[8,128], index: 3, kind: output, shape index: {}]
  %s4 = sld [smem:[#allocation0]]
  $region30: #{tpu_custom_call.1} parent=0
    _
  %s6 = ssub.s32 1, %s4
  %s7 = scalar_select 0, %s6, %s4
  $region1: #{tpu_custom_call.1} parent=0
    #allocation2 [shape = 'u8[4096]{0}', space=vmem, size = 0x1000, scoped, tag = 'input window, operand 0, single buffered']
    #allocation3 [shape = 's32[1]{0}', space=sflag, size = 0x4, scoped, tag = 'scoped memory for tpu_custom_call.1']
    #allocation4 [shape = 's32[1]{0}', space=sflag, size = 0x4, scoped, tag = 'scoped memory for tpu_custom_call.1']
    #allocation5 [shape = 'u8[65536]{0}', space=vmem, size = 0x10000, scoped, tag = 'input window, operand 1, single buffered']
    #allocation6 [shape = 's32[1]{0}', space=sflag, size = 0x4, scoped, tag = 'scoped memory for tpu_custom_call.1']
    #allocation7 [shape = 'u8[4096]{0}', space=vmem, size = 0x1000, scoped, tag = 'output window, operand 0, single buffered']
    %8 = vsyncpa [#allocation3], 0
    %9 = vsyncpa [#allocation6], 0
    %10 = vsyncpa [#allocation4], 0
    // Predicated region
    $region2: #{tpu_custom_call.1} parent=1 // pred_check
      _
    $region3: #{tpu_custom_call.1} parent=1 // pred_check_branch
      %12 = sbr.rel (0) target = $region5
    $region4: #{tpu_custom_call.1} parent=1 // pred_region
      %s14 = ssub.s32 128, 128
      %15 = vsyncadd [#allocation3], %s14
      %s17 = sshll.u32 [#allocation2], 4
      %s18 = int_to_ptr.vmem [resolvable:$true] %s17
      %20 = dma.hbm_to_vmem [thread:$0]  %s0, 128, %s18, [#allocation3]
    $region5: #{tpu_custom_call.1} parent=1 // pred_fallthru
      _
    // Predicated region
    $region6: #{tpu_custom_call.1} parent=1 // pred_check
      _
    $region7: #{tpu_custom_call.1} parent=1 // pred_check_branch
      %22 = sbr.rel (0) target = $region9
    $region8: #{tpu_custom_call.1} parent=1 // pred_region
      %s24 = ssub.s32 2048, 2048
      %25 = vsyncadd [#allocation6], %s24
      %s26 = sshll.u32 [#allocation5], 4
      %s27 = int_to_ptr.vmem [resolvable:$true] %s26
      %32 = dma.hbm_to_vmem [thread:$0]  %s1, 2048, %s27, [#allocation6], 128, 128, 8
    $region9: #{tpu_custom_call.1} parent=1 // pred_fallthru
      _
    // Predicated region
    $region10: #{tpu_custom_call.1} parent=1 // pred_check
      _
    $region11: #{tpu_custom_call.1} parent=1 // pred_check_branch
      %34 = sbr.rel (0) target = $region13
    $region12: #{tpu_custom_call.1} parent=1 // pred_region
      _
    $region13: #{tpu_custom_call.1} parent=1 // pred_fallthru
      _
    // Predicated region
    $region14: #{tpu_custom_call.1} parent=1 // pred_check
      _
    $region15: #{tpu_custom_call.1} parent=1 // pred_check_branch
      %36 = sbr.rel (0) target = $region17
    $region16: #{tpu_custom_call.1} parent=1 // pred_region
      %37 = dma.done [#allocation3], 128
    $region17: #{tpu_custom_call.1} parent=1 // pred_fallthru
      _
    // Predicated region
    $region18: #{tpu_custom_call.1} parent=1 // pred_check
      _
    $region19: #{tpu_custom_call.1} parent=1 // pred_check_branch
      %39 = sbr.rel (0) target = $region21
    $region20: #{tpu_custom_call.1} parent=1 // pred_region
      %40 = dma.done [#allocation6], 2048
    $region21: #{tpu_custom_call.1} parent=1 // pred_fallthru
      _
    %v41 = vld [vmem:[#allocation2] sm:$0xff]
    %v42 = vld [vmem:[#allocation5] sm:$0xff]
    %v43 = vld [vmem:[#allocation5 + $0x8] sm:$0xff]
    %v44 = vld [vmem:[#allocation5 + $0x10] sm:$0xff]
    %v45 = vld [vmem:[#allocation5 + $0x18] sm:$0xff]
    %v46 = vld [vmem:[#allocation5 + $0x20] sm:$0xff]
    %v47 = vld [vmem:[#allocation5 + $0x28] sm:$0xff]
    %v48 = vld [vmem:[#allocation5 + $0x30] sm:$0xff]
    %v49 = vld [vmem:[#allocation5 + $0x38] sm:$0xff]
    %v50 = vld [vmem:[#allocation5 + $0x40] sm:$0xff]
    %v51 = vld [vmem:[#allocation5 + $0x48] sm:$0xff]
    %v52 = vld [vmem:[#allocation5 + $0x50] sm:$0xff]
    %v53 = vld [vmem:[#allocation5 + $0x58] sm:$0xff]
    %v54 = vld [vmem:[#allocation5 + $0x60] sm:$0xff]
    %v55 = vld [vmem:[#allocation5 + $0x68] sm:$0xff]
    %v56 = vld [vmem:[#allocation5 + $0x70] sm:$0xff]
    %v57 = vld [vmem:[#allocation5 + $0x78] sm:$0xff]
    %v58 = vld [vmem:[%s2] sm:$0x1]
    %v60 = vlaneseq
    %v61 = vshrl.u32 %v60, 7
    %v62 = vsub.s32 0, %v61
    %v63 = vrot.slane %v58, %v62
    %65 = vmatprep.subr.mxu0 0.0
    %66 = vmatpush1.msra.mxu0 %v57
    %67 = vmatprep.subr.mxu0 0.0
    %68 = vmatpush1.msra.mxu0 %v56
    %69 = vmatprep.subr.mxu0 0.0
    %70 = vmatpush1.msra.mxu0 %v55
    %71 = vmatprep.subr.mxu0 0.0
    %72 = vmatpush1.msra.mxu0 %v54
    %73 = vmatprep.subr.mxu0 0.0
    %74 = vmatpush1.msra.mxu0 %v53
    %75 = vmatprep.subr.mxu0 0.0
    %76 = vmatpush1.msra.mxu0 %v52
    %77 = vmatprep.subr.mxu0 0.0
    %78 = vmatpush1.msra.mxu0 %v51
    %79 = vmatprep.subr.mxu0 0.0
    %80 = vmatpush1.msra.mxu0 %v50
    %81 = vmatprep.subr.mxu0 0.0
    %82 = vmatpush1.msra.mxu0 %v49
    %83 = vmatprep.subr.mxu0 0.0
    %84 = vmatpush1.msra.mxu0 %v48
    %85 = vmatprep.subr.mxu0 0.0
    %86 = vmatpush1.msra.mxu0 %v47
    %87 = vmatprep.subr.mxu0 0.0
    %88 = vmatpush1.msra.mxu0 %v46
    %89 = vmatprep.subr.mxu0 0.0
    %90 = vmatpush1.msra.mxu0 %v45
    %91 = vmatprep.subr.mxu0 0.0
    %92 = vmatpush1.msra.mxu0 %v44
    %93 = vmatprep.subr.mxu0 0.0
    %94 = vmatpush1.msra.mxu0 %v43
    %95 = vmatprep.subr.mxu0 0.0
    %96 = vmatpush1.msra.mxu0 %v42
    %97 = vmatprep.subr.mxu0 0.0
    %98 = vmatpush2.msra.mxu0 0.0
    %99 = vmatprep.subr.mxu0 0.0
    %100 = vmatpush2.msra.mxu0 0.0
    %101 = vmatprep.subr.mxu0 0.0
    %102 = vmatpush2.msra.mxu0 0.0
    %103 = vmatprep.subr.mxu0 0.0
    %104 = vmatpush2.msra.mxu0 0.0
    %105 = vmatprep.subr.mxu0 0.0
    %106 = vmatpush2.msra.mxu0 0.0
    %107 = vmatprep.subr.mxu0 0.0
    %108 = vmatpush2.msra.mxu0 0.0
    %109 = vmatprep.subr.mxu0 0.0
    %110 = vmatpush2.msra.mxu0 0.0
    %111 = vmatprep.subr.mxu0 0.0
    %112 = vmatpush2.msra.mxu0 0.0
    %113 = vmatprep.subr.mxu0 0.0
    %114 = vmatpush2.msra.mxu0 0.0
    %115 = vmatprep.subr.mxu0 0.0
    %116 = vmatpush2.msra.mxu0 0.0
    %117 = vmatprep.subr.mxu0 0.0
    %118 = vmatpush2.msra.mxu0 0.0
    %119 = vmatprep.subr.mxu0 0.0
    %120 = vmatpush2.msra.mxu0 0.0
    %121 = vmatprep.subr.mxu0 0.0
    %122 = vmatpush2.msra.mxu0 0.0
    %123 = vmatprep.subr.mxu0 0.0
    %124 = vmatpush2.msra.mxu0 0.0
    %125 = vmatprep.subr.mxu0 0.0
    %126 = vmatpush2.msra.mxu0 0.0
    %127 = vmatprep.subr.mxu0 0.0
    %128 = vmatpush2.msra.mxu0 0.0
    %129 = vmatprep.mubr.f32.mxu0 0.0
    %130 = vmatmul.mubr.f32.gmra.mxu0 %v41
    %v131 = vpop.f32.mrf.mxu0
    %v132 = vadd.f32 %v63, %v131
    %v133 = vpop.f32.mrf.mxu0
    %134 = vdwg.mxu0
    %135 = vst [vmem:[#allocation7] sm:$0xff] %v132
    // Predicated region
    $region22: #{tpu_custom_call.1} parent=1 // pred_check
      _
    $region23: #{tpu_custom_call.1} parent=1 // pred_check_branch
      %137 = sbr.rel (0) target = $region25
    $region24: #{tpu_custom_call.1} parent=1 // pred_region
      %s139 = ssub.s32 128, 128
      %140 = vsyncadd [#allocation4], %s139
      %s142 = sshll.u32 [#allocation7], 4
      %s143 = int_to_ptr.vmem [resolvable:$true] %s142
      %145 = dma.vmem_to_hbm [thread:$0]  %s143, 128, %s3, [#allocation4]
    $region25: #{tpu_custom_call.1} parent=1 // pred_fallthru
      _
    // Predicated region
    $region26: #{tpu_custom_call.1} parent=1 // pred_check
      _
    $region27: #{tpu_custom_call.1} parent=1 // pred_check_branch
      %147 = sbr.rel (0) target = $region29
    $region28: #{tpu_custom_call.1} parent=1 // pred_region
      %148 = dma.done [#allocation4], 128
    $region29: #{tpu_custom_call.1} parent=1 // pred_fallthru
      _
    %149 = vsyncpa [#allocation3], 1
    %150 = vsyncpa [#allocation6], 1
    %151 = vsyncpa [#allocation4], 1

</llo_original>
